<compile_context>
chip_gen: v6e
topology: v6e:2x2x1
jax: 0.10.0
libtpu: 0.0.40
codegen_flags: <defaults>
</compile_context>

<pallas_src>
import functools
import math

import jax
import jax.numpy as jnp
from jax.experimental import pallas as pl
from jax.experimental.pallas import tpu as pltpu


# ----------------------------------------------------------------------------
# Small helpers
# ----------------------------------------------------------------------------
def _ceil_to(v, m):
    return ((v + m - 1) // m) * m


def _pad_to(x, rows, cols):
    return jnp.pad(x, ((0, rows - x.shape[0]), (0, cols - x.shape[1])))


# ----------------------------------------------------------------------------
# Stage 1 kernel: XW = X @ W   (rows tiled, W resident)
# ----------------------------------------------------------------------------
def xw_kernel(x_ref, w_ref, o_ref):
    o_ref[...] = jnp.dot(
        x_ref[...], w_ref[...], preferred_element_type=jnp.float32
    ).astype(o_ref.dtype)


def _xw_matmul(x, w, *, tm):
    np_, fin = x.shape
    fout = w.shape[1]
    flops = 2 * np_ * fin * fout
    bytes_accessed = np_ * fin * 2 + fin * fout * 2 + np_ * fout * 2
    return pl.pallas_call(
        xw_kernel,
        out_shape=jax.ShapeDtypeStruct((np_, fout), jnp.bfloat16),
        grid=(np_ // tm,),
        in_specs=[
            pl.BlockSpec((tm, fin), lambda i: (i, 0)),     # X row tile
            pl.BlockSpec((fin, fout), lambda i: (0, 0)),   # W resident
        ],
        out_specs=pl.BlockSpec((tm, fout), lambda i: (i, 0)),
        compiler_params=pltpu.CompilerParams(dimension_semantics=("parallel",)),
        cost_estimate=pl.CostEstimate(
            flops=int(flops), transcendentals=0, bytes_accessed=int(bytes_accessed)
        ),
    )(x, w)


# ----------------------------------------------------------------------------
# Stage 2 kernel: H = ((1-a)*A_hat + a*I) @ XW + b  (+ optional fused ReLU)
# Grid: (row tiles [parallel], K tiles over N [arbitrary, last]) with an f32
# VMEM accumulator initialized/finalized via pl.when (pattern P3).
# ----------------------------------------------------------------------------
def dgcn_propagate_kernel(d_row_ref, d_col_ref, a_ref, xw_ref, b_ref, o_ref,
                          acc_ref, *, alpha, apply_relu, tm, tk):
    i = pl.program_id(0)
    k = pl.program_id(1)

    @pl.when(k == 0)
    def _():
        acc_ref[...] = jnp.zeros_like(acc_ref)

    # Build the (tm, tk) tile of M = (1-a) * D^-1/2 (A+I) D^-1/2 + a*I on the
    # VPU (hidden under the MXU matmul); adjacency is streamed raw in bf16.
    a = a_ref[...].astype(jnp.float32)
    d_r = d_row_ref[...].astype(jnp.float32)        # (tm, 1)
    d_c = d_col_ref[...].astype(jnp.float32)        # (1, tk)
    row_g = i * tm + jax.lax.broadcasted_iota(jnp.int32, (tm, tk), 0)
    col_g = k * tk + jax.lax.broadcasted_iota(jnp.int32, (tm, tk), 1)
    eye = (row_g == col_g).astype(jnp.float32)
    m = (1.0 - alpha) * (d_r * (a + eye) * d_c) + alpha * eye

    acc_ref[...] += jnp.dot(
        m.astype(jnp.bfloat16), xw_ref[...], preferred_element_type=jnp.float32
    )

    @pl.when(k == pl.num_programs(1) - 1)
    def _():
        h = acc_ref[...] + b_ref[...]
        if apply_relu:
            h = jnp.maximum(h, 0.0)
        o_ref[...] = h.astype(o_ref.dtype)


def _propagate(a_pad, d_row, d_col, xw, b, *, alpha, apply_relu, tm, tk,
               out_dtype):
    np_ = a_pad.shape[0]
    fout = xw.shape[1]
    gm, gk = np_ // tm, np_ // tk
    kernel = functools.partial(
        dgcn_propagate_kernel, alpha=float(alpha), apply_relu=apply_relu,
        tm=tm, tk=tk,
    )
    flops = 2 * np_ * np_ * fout + 8 * np_ * np_
    bytes_accessed = (np_ * np_ * 2                       # raw A (bf16), once
                      + gm * np_ * fout * 2               # XW re-streamed / row tile
                      + np_ * fout * jnp.dtype(out_dtype).itemsize
                      + np_ * 8 + fout * 4)
    # NOTE(v7x): with bigger graphs, raise tk (K over N) and set
    # vmem_limit_bytes so the double-buffered A tiles stay within 64 MiB VMEM.
    return pl.pallas_call(
        kernel,
        out_shape=jax.ShapeDtypeStruct((np_, fout), out_dtype),
        grid=(gm, gk),
        in_specs=[
            pl.BlockSpec((tm, 1), lambda i, k: (i, 0)),     # D^-1/2 (rows)
            pl.BlockSpec((1, tk), lambda i, k: (0, k)),     # D^-1/2 (cols)
            pl.BlockSpec((tm, tk), lambda i, k: (i, k)),    # raw A tile (bf16)
            pl.BlockSpec((tk, fout), lambda i, k: (k, 0)),  # XW K-tile (bf16)
            pl.BlockSpec((1, fout), lambda i, k: (0, 0)),   # bias, resident
        ],
        out_specs=pl.BlockSpec((tm, fout), lambda i, k: (i, 0)),
        scratch_shapes=[pltpu.VMEM((tm, fout), jnp.float32)],
        compiler_params=pltpu.CompilerParams(
            dimension_semantics=("parallel", "arbitrary")),
        cost_estimate=pl.CostEstimate(
            flops=int(flops), transcendentals=0, bytes_accessed=int(bytes_accessed)
        ),
    )(d_row, d_col, a_pad, xw, b)


# ----------------------------------------------------------------------------
# Tiled two-layer forward (scales past VMEM-resident graphs)
# ----------------------------------------------------------------------------
def dgcn_forward_tiled(adj, x, w1, b1, w2, b2, *, alpha, tm=256, tk=256):
    n = adj.shape[0]
    in_size, h_feats, num_classes = x.shape[1], w1.shape[1], w2.shape[1]

    np_ = _ceil_to(n, math.lcm(tm, tk))
    fin_p = _ceil_to(in_size, 128)    # lane-dense (128-padded) feature dims
    h_p = _ceil_to(h_feats, 128)
    c_p = _ceil_to(num_classes, 128)

    # D^{-1/2} of (A + I); self-loops + normalization are applied in-kernel so
    # A_hat is never materialized in HBM.
    deg = jnp.sum(adj, axis=1) + 1.0
    dis = jnp.pad(jax.lax.rsqrt(deg), (0, np_ - n)).astype(jnp.float32)
    d_row = dis[:, None]                               # (Np, 1)
    d_col = dis[None, :]                               # (1, Np)

    a_p = _pad_to(adj, np_, np_).astype(jnp.bfloat16)  # raw adjacency, bf16
    x_p = _pad_to(x, np_, fin_p).astype(jnp.bfloat16)
    w1_p = _pad_to(w1, fin_p, h_p).astype(jnp.bfloat16)
    b1_p = _pad_to(b1.reshape(1, -1), 1, h_p).astype(jnp.float32)
    w2_p = _pad_to(w2, h_p, c_p).astype(jnp.bfloat16)
    b2_p = _pad_to(b2.reshape(1, -1), 1, c_p).astype(jnp.float32)

    # Layer 1: XW, then tiled propagation with fused bias + ReLU epilogue.
    xw1 = _xw_matmul(x_p, w1_p, tm=tm)
    h1 = _propagate(a_p, d_row, d_col, xw1, b1_p, alpha=alpha,
                    apply_relu=True, tm=tm, tk=tk, out_dtype=jnp.bfloat16)
    # Dropout(0.5) -> identity in eval mode.
    # Layer 2.
    xw2 = _xw_matmul(h1, w2_p, tm=tm)
    h2 = _propagate(a_p, d_row, d_col, xw2, b2_p, alpha=alpha,
                    apply_relu=False, tm=tm, tk=tk, out_dtype=jnp.float32)
    return h2[:n, :num_classes]


# ----------------------------------------------------------------------------
# Fully fused single-call forward for tiny graphs (everything fits in VMEM):
# one pallas_call does conv1 + ReLU + conv2, avoiding the extra launches and
# the HBM round trip of H.
# ----------------------------------------------------------------------------
def dgcn_fused_kernel(d_row_ref, d_col_ref, a_ref, x_ref, w1_ref, b1_ref,
                      w2_ref, b2_ref, o_ref, *, alpha):
    n = a_ref.shape[0]
    a = a_ref[...].astype(jnp.float32)
    d_r = d_row_ref[...].astype(jnp.float32)          # (n, 1)
    d_c = d_col_ref[...].astype(jnp.float32)          # (1, n)
    row = jax.lax.broadcasted_iota(jnp.int32, (n, n), 0)
    col = jax.lax.broadcasted_iota(jnp.int32, (n, n), 1)
    eye = (row == col).astype(jnp.float32)
    m = ((1.0 - alpha) * (d_r * (a + eye) * d_c) + alpha * eye).astype(jnp.bfloat16)

    xw1 = jnp.dot(x_ref[...], w1_ref[...], preferred_element_type=jnp.float32)
    h1 = jnp.dot(m, xw1.astype(jnp.bfloat16),
                 preferred_element_type=jnp.float32) + b1_ref[...]
    h1 = jnp.maximum(h1, 0.0).astype(jnp.bfloat16)    # F.relu; dropout = id (eval)
    xw2 = jnp.dot(h1, w2_ref[...], preferred_element_type=jnp.float32)
    h2 = jnp.dot(m, xw2.astype(jnp.bfloat16),
                 preferred_element_type=jnp.float32) + b2_ref[...]
    o_ref[...] = h2.astype(o_ref.dtype)


def dgcn_forward_fused(adj, x, w1, b1, w2, b2, *, alpha):
    n = adj.shape[0]
    in_size, h_feats, num_classes = x.shape[1], w1.shape[1], w2.shape[1]

    np_ = _ceil_to(n, 128)
    fin_p = _ceil_to(in_size, 128)
    h_p = _ceil_to(h_feats, 128)
    c_p = _ceil_to(num_classes, 128)

    deg = jnp.sum(adj, axis=1) + 1.0
    dis = jnp.pad(jax.lax.rsqrt(deg), (0, np_ - n)).astype(jnp.float32)
    d_row = dis[:, None]
    d_col = dis[None, :]

    a_p = _pad_to(adj, np_, np_).astype(jnp.bfloat16)
    x_p = _pad_to(x, np_, fin_p).astype(jnp.bfloat16)
    w1_p = _pad_to(w1, fin_p, h_p).astype(jnp.bfloat16)
    b1_p = _pad_to(b1.reshape(1, -1), 1, h_p).astype(jnp.float32)
    w2_p = _pad_to(w2, h_p, c_p).astype(jnp.bfloat16)
    b2_p = _pad_to(b2.reshape(1, -1), 1, c_p).astype(jnp.float32)

    flops = (2 * np_ * fin_p * h_p + 2 * np_ * np_ * h_p
             + 2 * np_ * h_p * c_p + 2 * np_ * np_ * c_p + 8 * np_ * np_)
    bytes_accessed = (np_ * np_ * 2 + np_ * fin_p * 2 + fin_p * h_p * 2
                      + h_p * c_p * 2 + np_ * c_p * 4 + np_ * 8
                      + (h_p + c_p) * 4)

    kernel = functools.partial(dgcn_fused_kernel, alpha=float(alpha))
    out = pl.pallas_call(
        kernel,
        out_shape=jax.ShapeDtypeStruct((np_, c_p), jnp.float32),
        grid=(1,),
        in_specs=[
            pl.BlockSpec((np_, 1), lambda i: (0, 0)),
            pl.BlockSpec((1, np_), lambda i: (0, 0)),
            pl.BlockSpec((np_, np_), lambda i: (0, 0)),
            pl.BlockSpec((np_, fin_p), lambda i: (0, 0)),
            pl.BlockSpec((fin_p, h_p), lambda i: (0, 0)),
            pl.BlockSpec((1, h_p), lambda i: (0, 0)),
            pl.BlockSpec((h_p, c_p), lambda i: (0, 0)),
            pl.BlockSpec((1, c_p), lambda i: (0, 0)),
        ],
        out_specs=pl.BlockSpec((np_, c_p), lambda i: (0, 0)),
        compiler_params=pltpu.CompilerParams(dimension_semantics=("arbitrary",)),
        cost_estimate=pl.CostEstimate(
            flops=int(flops), transcendentals=0, bytes_accessed=int(bytes_accessed)
        ),
    )(d_row, d_col, a_p, x_p, w1_p, b1_p, w2_p, b2_p)
    return out[:n, :num_classes]


# ----------------------------------------------------------------------------
# Pure-JAX f32 reference (for correctness checking only)
# ----------------------------------------------------------------------------
def dgcn_forward_ref(adj, x, w1, b1, w2, b2, *, alpha):
    n = adj.shape[0]
    a = adj + jnp.eye(n, dtype=adj.dtype)
    deg = jnp.sum(a, axis=1)
    dis = jnp.where(deg > 0, jax.lax.rsqrt(deg), 0.0)
    a_hat = a * dis[:, None] * dis[None, :]

    def layer(h, w, b, relu):
        hw = h @ w
        out = alpha * hw + (1.0 - alpha) * (a_hat @ hw) + b
        return jnp.maximum(out, 0.0) if relu else out

    h = layer(x, w1, b1, True)      # conv1 + relu (+ dropout eval identity)
    return layer(h, w2, b2, False)  # conv2


# ----------------------------------------------------------------------------
# Demo
# ----------------------------------------------------------------------------
if __name__ == "__main__":
    def make_case(key, n, in_size, h_feats, num_classes):
        k_adj, k_x, k_w1, k_b1, k_w2, k_b2 = jax.random.split(key, 6)
        logits = jax.random.uniform(k_adj, (n, n))
        adj = (logits + logits.T > 1.0).astype(jnp.float32)
        adj = adj * (1.0 - jnp.eye(n, dtype=jnp.float32))      # no self loops
        x = jax.random.normal(k_x, (n, in_size), jnp.float32)

        def glorot(k, fi, fo):
            lim = float(jnp.sqrt(6.0 / (fi + fo)))
            return jax.random.uniform(k, (fi, fo), jnp.float32, -lim, lim)

        w1 = glorot(k_w1, in_size, h_feats)
        b1 = 0.1 * jax.random.normal(k_b1, (h_feats,), jnp.float32)
        w2 = glorot(k_w2, h_feats, num_classes)
        b2 = 0.1 * jax.random.normal(k_b2, (num_classes,), jnp.float32)
        return adj, x, w1, b1, w2, b2

    ALPHA = 0.1
    key = jax.random.PRNGKey(0)
    k1, k2 = jax.random.split(key)

    # Case 1: spec-sized tiny graph -> fully fused single pallas_call.
    adj, x, w1, b1, w2, b2 = make_case(k1, 16, 32, 32, 4)
    out_fused = jax.block_until_ready(
        dgcn_forward_fused(adj, x, w1, b1, w2, b2, alpha=ALPHA))
    ref = dgcn_forward_ref(adj, x, w1, b1, w2, b2, alpha=ALPHA)
    assert out_fused.shape == (16, 4), out_fused.shape
    assert jnp.all(jnp.isfinite(out_fused))
    assert jnp.allclose(out_fused, ref, rtol=5e-2, atol=5e-2)

    # Case 2: modest graph -> tiled / pipelined path (3x3 grid of 256-tiles).
    adj, x, w1, b1, w2, b2 = make_case(k2, 600, 48, 64, 7)
    out_tiled = jax.block_until_ready(
        dgcn_forward_tiled(adj, x, w1, b1, w2, b2, alpha=ALPHA, tm=256, tk=256))
    ref = dgcn_forward_ref(adj, x, w1, b1, w2, b2, alpha=ALPHA)
    assert out_tiled.shape == (600, 7), out_tiled.shape
    assert jnp.all(jnp.isfinite(out_tiled))
    assert jnp.allclose(out_tiled, ref, rtol=5e-2, atol=5e-2)

    print("KERNEL_OK")
</pallas_src>

<mosaic_0001>
module attributes {stable_mosaic.version = 11 : i64} {
  func.func @dgcn_fused_kernel(%arg0: i32, %arg1: memref<128x1xf32, #tpu.memory_space<vmem>>, %arg2: memref<1x128xf32, #tpu.memory_space<vmem>>, %arg3: memref<128x128xbf16, #tpu.memory_space<vmem>>, %arg4: memref<128x128xbf16, #tpu.memory_space<vmem>>, %arg5: memref<128x128xbf16, #tpu.memory_space<vmem>>, %arg6: memref<1x128xf32, #tpu.memory_space<vmem>>, %arg7: memref<128x128xbf16, #tpu.memory_space<vmem>>, %arg8: memref<1x128xf32, #tpu.memory_space<vmem>>, %arg9: memref<128x128xf32, #tpu.memory_space<vmem>>) attributes {dimension_semantics = [#tpu.dimension_semantics<arbitrary>], iteration_bounds = array<i64: 1>, scalar_prefetch = 0 : i64, scratch_operands = 0 : i64, tpu.core_type = #tpu.core_type<tc>, window_params = [{pipeline_mode = #tpu.pipeline_mode<synchronous>, transform_indices = @transform_0, window_bounds = array<i64: 128, 1>}, {pipeline_mode = #tpu.pipeline_mode<synchronous>, transform_indices = @transform_1, window_bounds = array<i64: 1, 128>}, {pipeline_mode = #tpu.pipeline_mode<synchronous>, transform_indices = @transform_2, window_bounds = array<i64: 128, 128>}, {pipeline_mode = #tpu.pipeline_mode<synchronous>, transform_indices = @transform_3, window_bounds = array<i64: 128, 128>}, {pipeline_mode = #tpu.pipeline_mode<synchronous>, transform_indices = @transform_4, window_bounds = array<i64: 128, 128>}, {pipeline_mode = #tpu.pipeline_mode<synchronous>, transform_indices = @transform_5, window_bounds = array<i64: 1, 128>}, {pipeline_mode = #tpu.pipeline_mode<synchronous>, transform_indices = @transform_6, window_bounds = array<i64: 128, 128>}, {pipeline_mode = #tpu.pipeline_mode<synchronous>, transform_indices = @transform_7, window_bounds = array<i64: 1, 128>}, {pipeline_mode = #tpu.pipeline_mode<synchronous>, transform_indices = @transform_8, window_bounds = array<i64: 128, 128>}]} {
    %c0 = arith.constant 0 : index
    %c0_0 = arith.constant 0 : index
    %0 = vector.load %arg3[%c0, %c0_0] : memref<128x128xbf16, #tpu.memory_space<vmem>>, vector<128x128xbf16>
    %1 = arith.extf %0 : vector<128x128xbf16> to vector<128x128xf32>
    %c0_1 = arith.constant 0 : index
    %c0_2 = arith.constant 0 : index
    %2 = vector.load %arg1[%c0_1, %c0_2] : memref<128x1xf32, #tpu.memory_space<vmem>>, vector<128x1xf32>
    %c0_3 = arith.constant 0 : index
    %c0_4 = arith.constant 0 : index
    %3 = vector.load %arg2[%c0_3, %c0_4] : memref<1x128xf32, #tpu.memory_space<vmem>>, vector<1x128xf32>
    %4 = tpu.iota {dimensions = array<i32: 0>} : vector<128x128xi32>
    %5 = tpu.iota {dimensions = array<i32: 1>} : vector<128x128xi32>
    %6 = arith.cmpi eq, %4, %5 : vector<128x128xi32>
    %7 = arith.extui %6 : vector<128x128xi1> to vector<128x128xi32>
    %8 = arith.sitofp %7 : vector<128x128xi32> to vector<128x128xf32>
    %9 = arith.addf %1, %8 : vector<128x128xf32>
    %10 = vector.broadcast %2 : vector<128x1xf32> to vector<128x128xf32>
    %11 = arith.mulf %10, %9 : vector<128x128xf32>
    %12 = vector.broadcast %3 : vector<1x128xf32> to vector<128x128xf32>
    %13 = arith.mulf %11, %12 : vector<128x128xf32>
    %cst = arith.constant 0.899999976 : f32
    %14 = vector.broadcast %cst : f32 to vector<128x128xf32>
    %15 = arith.mulf %14, %13 : vector<128x128xf32>
    %cst_5 = arith.constant 1.000000e-01 : f32
    %16 = vector.broadcast %cst_5 : f32 to vector<128x128xf32>
    %17 = arith.mulf %16, %8 : vector<128x128xf32>
    %18 = arith.addf %15, %17 : vector<128x128xf32>
    %19 = arith.truncf %18 : vector<128x128xf32> to vector<128x128xbf16>
    %c0_6 = arith.constant 0 : index
    %c0_7 = arith.constant 0 : index
    %20 = vector.load %arg4[%c0_6, %c0_7] : memref<128x128xbf16, #tpu.memory_space<vmem>>, vector<128x128xbf16>
    %c0_8 = arith.constant 0 : index
    %c0_9 = arith.constant 0 : index
    %21 = vector.load %arg5[%c0_8, %c0_9] : memref<128x128xbf16, #tpu.memory_space<vmem>>, vector<128x128xbf16>
    %cst_10 = arith.constant dense<0.000000e+00> : vector<128x128xf32>
    %22 = tpu.matmul %20, %21, %cst_10 {dimension_numbers = #tpu.dot_dimension_numbers<[1], [0], [0], [1], [0, 0, 1, 1], [], []>} : vector<128x128xbf16>, vector<128x128xbf16>, vector<128x128xf32> -> vector<128x128xf32>
    %23 = arith.truncf %22 : vector<128x128xf32> to vector<128x128xbf16>
    %cst_11 = arith.constant dense<0.000000e+00> : vector<128x128xf32>
    %24 = tpu.matmul %19, %23, %cst_11 {dimension_numbers = #tpu.dot_dimension_numbers<[1], [0], [0], [1], [0, 0, 1, 1], [], []>} : vector<128x128xbf16>, vector<128x128xbf16>, vector<128x128xf32> -> vector<128x128xf32>
    %c0_12 = arith.constant 0 : index
    %c0_13 = arith.constant 0 : index
    %25 = vector.load %arg6[%c0_12, %c0_13] : memref<1x128xf32, #tpu.memory_space<vmem>>, vector<1x128xf32>
    %26 = vector.broadcast %25 : vector<1x128xf32> to vector<128x128xf32>
    %27 = arith.addf %24, %26 : vector<128x128xf32>
    %cst_14 = arith.constant 0.000000e+00 : f32
    %28 = vector.broadcast %cst_14 : f32 to vector<128x128xf32>
    %29 = arith.maximumf %27, %28 : vector<128x128xf32>
    %30 = arith.truncf %29 : vector<128x128xf32> to vector<128x128xbf16>
    %c0_15 = arith.constant 0 : index
    %c0_16 = arith.constant 0 : index
    %31 = vector.load %arg7[%c0_15, %c0_16] : memref<128x128xbf16, #tpu.memory_space<vmem>>, vector<128x128xbf16>
    %cst_17 = arith.constant dense<0.000000e+00> : vector<128x128xf32>
    %32 = tpu.matmul %30, %31, %cst_17 {dimension_numbers = #tpu.dot_dimension_numbers<[1], [0], [0], [1], [0, 0, 1, 1], [], []>} : vector<128x128xbf16>, vector<128x128xbf16>, vector<128x128xf32> -> vector<128x128xf32>
    %33 = arith.truncf %32 : vector<128x128xf32> to vector<128x128xbf16>
    %cst_18 = arith.constant dense<0.000000e+00> : vector<128x128xf32>
    %34 = tpu.matmul %19, %33, %cst_18 {dimension_numbers = #tpu.dot_dimension_numbers<[1], [0], [0], [1], [0, 0, 1, 1], [], []>} : vector<128x128xbf16>, vector<128x128xbf16>, vector<128x128xf32> -> vector<128x128xf32>
    %c0_19 = arith.constant 0 : index
    %c0_20 = arith.constant 0 : index
    %35 = vector.load %arg8[%c0_19, %c0_20] : memref<1x128xf32, #tpu.memory_space<vmem>>, vector<1x128xf32>
    %36 = vector.broadcast %35 : vector<1x128xf32> to vector<128x128xf32>
    %37 = arith.addf %34, %36 : vector<128x128xf32>
    %c0_21 = arith.constant 0 : index
    %c0_22 = arith.constant 0 : index
    %38 = vector.load %arg9[%c0_21, %c0_22] : memref<128x128xf32, #tpu.memory_space<vmem>>, vector<128x128xf32>
    tpu.vector_store %arg9[%c0_21, %c0_22], %37 {strides = array<i32>} : memref<128x128xf32, #tpu.memory_space<vmem>>, vector<128x128xf32>,
    return
  }
  func.func @transform_0(%arg0: i32) -> (i32, i32) {
    %c0_i32 = arith.constant 0 : i32
    %c0_i32_0 = arith.constant 0 : i32
    %c0_i32_1 = arith.constant 0 : i32
    return %c0_i32, %c0_i32_0 : i32, i32
  }
  func.func @transform_1(%arg0: i32) -> (i32, i32) {
    %c0_i32 = arith.constant 0 : i32
    %c0_i32_0 = arith.constant 0 : i32
    %c0_i32_1 = arith.constant 0 : i32
    return %c0_i32, %c0_i32_0 : i32, i32
  }
  func.func @transform_2(%arg0: i32) -> (i32, i32) {
    %c0_i32 = arith.constant 0 : i32
    %c0_i32_0 = arith.constant 0 : i32
    %c0_i32_1 = arith.constant 0 : i32
    return %c0_i32, %c0_i32_0 : i32, i32
  }
  func.func @transform_3(%arg0: i32) -> (i32, i32) {
    %c0_i32 = arith.constant 0 : i32
    %c0_i32_0 = arith.constant 0 : i32
    %c0_i32_1 = arith.constant 0 : i32
    return %c0_i32, %c0_i32_0 : i32, i32
  }
  func.func @transform_4(%arg0: i32) -> (i32, i32) {
    %c0_i32 = arith.constant 0 : i32
    %c0_i32_0 = arith.constant 0 : i32
    %c0_i32_1 = arith.constant 0 : i32
    return %c0_i32, %c0_i32_0 : i32, i32
  }
  func.func @transform_5(%arg0: i32) -> (i32, i32) {
    %c0_i32 = arith.constant 0 : i32
    %c0_i32_0 = arith.constant 0 : i32
    %c0_i32_1 = arith.constant 0 : i32
    return %c0_i32, %c0_i32_0 : i32, i32
  }
  func.func @transform_6(%arg0: i32) -> (i32, i32) {
    %c0_i32 = arith.constant 0 : i32
    %c0_i32_0 = arith.constant 0 : i32
    %c0_i32_1 = arith.constant 0 : i32
    return %c0_i32, %c0_i32_0 : i32, i32
  }
  func.func @transform_7(%arg0: i32) -> (i32, i32) {
    %c0_i32 = arith.constant 0 : i32
    %c0_i32_0 = arith.constant 0 : i32
    %c0_i32_1 = arith.constant 0 : i32
    return %c0_i32, %c0_i32_0 : i32, i32
  }
  func.func @transform_8(%arg0: i32) -> (i32, i32) {
    %c0_i32 = arith.constant 0 : i32
    %c0_i32_0 = arith.constant 0 : i32
    %c0_i32_1 = arith.constant 0 : i32
    return %c0_i32, %c0_i32_0 : i32, i32
  }
}

</mosaic_0001>

<llo_original>
// kernel: tpu_custom_call.1
$region0: #{tpu_custom_call.1}
  #allocation0 [shape = 'u32[]', space=smem, size = 0x4, offset = 0x4, fixed_abs, tag = 'smem constant byte address 0x4 - core index']
  #allocation1 [shape = 'u32[144,128]{1,0:T(1,128)}', space=vmem, size = 0x12000, scoped, tag = 'internal scratch']
  %s0 = inlined_call_operand.vmem [shape: f32[128,1], index: 0, kind: input, shape index: {}]
  %s1 = inlined_call_operand.vmem [shape: f32[1,128], index: 1, kind: input, shape index: {}]
  %s2 = inlined_call_operand.vmem [shape: bf16[128,128], index: 2, kind: input, shape index: {}]
  %s3 = inlined_call_operand.vmem [shape: bf16[128,128], index: 3, kind: input, shape index: {}]
  %s4 = inlined_call_operand.hbm [shape: bf16[128,128], index: 4, kind: input, shape index: {}]
  %s5 = inlined_call_operand.vmem [shape: f32[1,128], index: 5, kind: input, shape index: {}]
  %s6 = inlined_call_operand.hbm [shape: bf16[128,128], index: 6, kind: input, shape index: {}]
  %s7 = inlined_call_operand.vmem [shape: f32[1,128], index: 7, kind: input, shape index: {}]
  %s8 = inlined_call_operand.hbm [shape: f32[128,128], index: 8, kind: output, shape index: {}]
  %s9 = sld [smem:[#allocation0]]
  $region50: #{tpu_custom_call.1} parent=0
    _
  %s11 = ssub.s32 1, %s9
  %s12 = scalar_select 0, %s11, %s9
  $region1: #{tpu_custom_call.1} parent=0
    #allocation2 [shape = 'u8[32768]{0}', space=vmem, size = 0x8000, scoped, tag = 'input window, operand 4, single buffered']
    #allocation3 [shape = 's32[1]{0}', space=sflag, size = 0x4, scoped, tag = 'scoped memory for tpu_custom_call.1']
    #allocation4 [shape = 's32[1]{0}', space=sflag, size = 0x4, scoped, tag = 'scoped memory for tpu_custom_call.1']
    #allocation5 [shape = 'u8[32768]{0}', space=vmem, size = 0x8000, scoped, tag = 'input window, operand 6, single buffered']
    #allocation6 [shape = 's32[1]{0}', space=sflag, size = 0x4, scoped, tag = 'scoped memory for tpu_custom_call.1']
    #allocation7 [shape = 'u8[65536]{0}', space=vmem, size = 0x10000, scoped, tag = 'output window, operand 0, single buffered']
    %13 = vsyncpa [#allocation3], 0
    %14 = vsyncpa [#allocation6], 0
    %15 = vsyncpa [#allocation4], 0
    // Predicated region
    $region2: #{tpu_custom_call.1} parent=1 // pred_check
      _
    $region3: #{tpu_custom_call.1} parent=1 // pred_check_branch
      %17 = sbr.rel (0) target = $region5
    $region4: #{tpu_custom_call.1} parent=1 // pred_region
      _
    $region5: #{tpu_custom_call.1} parent=1 // pred_fallthru
      _
    // Predicated region
    $region6: #{tpu_custom_call.1} parent=1 // pred_check
      _
    $region7: #{tpu_custom_call.1} parent=1 // pred_check_branch
      %19 = sbr.rel (0) target = $region9
    $region8: #{tpu_custom_call.1} parent=1 // pred_region
      _
    $region9: #{tpu_custom_call.1} parent=1 // pred_fallthru
      _
    // Predicated region
    $region10: #{tpu_custom_call.1} parent=1 // pred_check
      _
    $region11: #{tpu_custom_call.1} parent=1 // pred_check_branch
      %21 = sbr.rel (0) target = $region13
    $region12: #{tpu_custom_call.1} parent=1 // pred_region
      _
    $region13: #{tpu_custom_call.1} parent=1 // pred_fallthru
      _
    // Predicated region
    $region14: #{tpu_custom_call.1} parent=1 // pred_check
      _
    $region15: #{tpu_custom_call.1} parent=1 // pred_check_branch
      %23 = sbr.rel (0) target = $region17
    $region16: #{tpu_custom_call.1} parent=1 // pred_region
      _
    $region17: #{tpu_custom_call.1} parent=1 // pred_fallthru
      _
    // Predicated region
    $region18: #{tpu_custom_call.1} parent=1 // pred_check
      _
    $region19: #{tpu_custom_call.1} parent=1 // pred_check_branch
      %25 = sbr.rel (0) target = $region21
    $region20: #{tpu_custom_call.1} parent=1 // pred_region
      %s27 = ssub.s32 1024, 1024
      %28 = vsyncadd [#allocation3], %s27
      %s29 = sshll.u32 [#allocation2], 4
      %s30 = int_to_ptr.vmem [resolvable:$true] %s29
      %35 = dma.hbm_to_vmem [thread:$0]  %s4, 1024, %s30, [#allocation3], 64, 64, 4
    $region21: #{tpu_custom_call.1} parent=1 // pred_fallthru
      _
    // Predicated region
    $region22: #{tpu_custom_call.1} parent=1 // pred_check
      _
    $region23: #{tpu_custom_call.1} parent=1 // pred_check_branch
      %37 = sbr.rel (0) target = $region25
    $region24: #{tpu_custom_call.1} parent=1 // pred_region
      _
    $region25: #{tpu_custom_call.1} parent=1 // pred_fallthru
      _
    // Predicated region
    $region26: #{tpu_custom_call.1} parent=1 // pred_check
      _
    $region27: #{tpu_custom_call.1} parent=1 // pred_check_branch
      %39 = sbr.rel (0) target = $region29
    $region28: #{tpu_custom_call.1} parent=1 // pred_region
      %s41 = ssub.s32 1024, 1024
      %42 = vsyncadd [#allocation6], %s41
      %s43 = sshll.u32 [#allocation5], 4
      %s44 = int_to_ptr.vmem [resolvable:$true] %s43
      %49 = dma.hbm_to_vmem [thread:$0]  %s6, 1024, %s44, [#allocation6], 64, 64, 4
    $region29: #{tpu_custom_call.1} parent=1 // pred_fallthru
      _
    // Predicated region
    $region30: #{tpu_custom_call.1} parent=1 // pred_check
      _
    $region31: #{tpu_custom_call.1} parent=1 // pred_check_branch
      %51 = sbr.rel (0) target = $region33
    $region32: #{tpu_custom_call.1} parent=1 // pred_region
      _
    $region33: #{tpu_custom_call.1} parent=1 // pred_fallthru
      _
    // Predicated region
    $region34: #{tpu_custom_call.1} parent=1 // pred_check
      _
    $region35: #{tpu_custom_call.1} parent=1 // pred_check_branch
      %53 = sbr.rel (0) target = $region37
    $region36: #{tpu_custom_call.1} parent=1 // pred_region
      %54 = dma.done [#allocation3], 1024
    $region37: #{tpu_custom_call.1} parent=1 // pred_fallthru
      _
    // Predicated region
    $region38: #{tpu_custom_call.1} parent=1 // pred_check
      _
    $region39: #{tpu_custom_call.1} parent=1 // pred_check_branch
      %56 = sbr.rel (0) target = $region41
    $region40: #{tpu_custom_call.1} parent=1 // pred_region
      %57 = dma.done [#allocation6], 1024
    $region41: #{tpu_custom_call.1} parent=1 // pred_fallthru
      _
    %v59 = vld [vmem:[%s2] sm:$0xf]
    %v60 = vld [vmem:[%s2 + $0x4] sm:$0xf]
    %v61 = vld [vmem:[%s2 + $0x8] sm:$0xf]
    %v62 = vld [vmem:[%s2 + $0xc] sm:$0xf]
    %v63 = vld [vmem:[%s2 + $0x10] sm:$0xf]
    %v64 = vld [vmem:[%s2 + $0x14] sm:$0xf]
    %v65 = vld [vmem:[%s2 + $0x18] sm:$0xf]
    %v66 = vld [vmem:[%s2 + $0x1c] sm:$0xf]
    %v67 = vld [vmem:[%s2 + $0x20] sm:$0xf]
    %v68 = vld [vmem:[%s2 + $0x24] sm:$0xf]
    %v69 = vld [vmem:[%s2 + $0x28] sm:$0xf]
    %v70 = vld [vmem:[%s2 + $0x2c] sm:$0xf]
    %v71 = vld [vmem:[%s2 + $0x30] sm:$0xf]
    %v72 = vld [vmem:[%s2 + $0x34] sm:$0xf]
    %v73 = vld [vmem:[%s2 + $0x38] sm:$0xf]
    %v74 = vld [vmem:[%s2 + $0x3c] sm:$0xf]
    %v75 = vunpack.c.l.bf16 %v59
    %v76 = vunpack.c.l.bf16 %v60
    %v77 = vunpack.c.l.bf16 %v61
    %v78 = vunpack.c.l.bf16 %v62
    %v79 = vunpack.c.l.bf16 %v63
    %v80 = vunpack.c.l.bf16 %v64
    %v81 = vunpack.c.l.bf16 %v65
    %v82 = vunpack.c.l.bf16 %v66
    %v83 = vunpack.c.l.bf16 %v67
    %v84 = vunpack.c.l.bf16 %v68
    %v85 = vunpack.c.l.bf16 %v69
    %v86 = vunpack.c.l.bf16 %v70
    %v87 = vunpack.c.l.bf16 %v71
    %v88 = vunpack.c.l.bf16 %v72
    %v89 = vunpack.c.l.bf16 %v73
    %v90 = vunpack.c.l.bf16 %v74
    %v91 = vld [vmem:[%s0] sm:$0xff]
    %v92 = vld [vmem:[%s0 + $0x8] sm:$0xff]
    %v93 = vld [vmem:[%s0 + $0x10] sm:$0xff]
    %v94 = vld [vmem:[%s0 + $0x18] sm:$0xff]
    %v95 = vld [vmem:[%s0 + $0x20] sm:$0xff]
    %v96 = vld [vmem:[%s0 + $0x28] sm:$0xff]
    %v97 = vld [vmem:[%s0 + $0x30] sm:$0xff]
    %v98 = vld [vmem:[%s0 + $0x38] sm:$0xff]
    %v99 = vld [vmem:[%s0 + $0x40] sm:$0xff]
    %v100 = vld [vmem:[%s0 + $0x48] sm:$0xff]
    %v101 = vld [vmem:[%s0 + $0x50] sm:$0xff]
    %v102 = vld [vmem:[%s0 + $0x58] sm:$0xff]
    %v103 = vld [vmem:[%s0 + $0x60] sm:$0xff]
    %v104 = vld [vmem:[%s0 + $0x68] sm:$0xff]
    %v105 = vld [vmem:[%s0 + $0x70] sm:$0xff]
    %v106 = vld [vmem:[%s0 + $0x78] sm:$0xff]
    %v107 = vld [vmem:[%s1] sm:$0x1]
    %v108 = vlaneseq
    %v109 = vshrl.u32 %v108, 7
    %v110 = vadd.s32 %v109, 8
    %v111 = vadd.s32 %v109, 16
    %v112 = vadd.s32 %v109, 24
    %v113 = vadd.s32 %v109, 32
    %v114 = vadd.s32 %v109, 40
    %v115 = vadd.s32 %v109, 48
    %v116 = vadd.s32 %v109, 56
    %v117 = vadd.s32 %v109, 64
    %v118 = vadd.s32 %v109, 72
    %v119 = vadd.s32 %v109, 80
    %v120 = vadd.s32 %v109, 88
    %v121 = vadd.s32 %v109, 96
    %v122 = vadd.s32 %v109, 104
    %v123 = vadd.s32 %v109, 112
    %v124 = vadd.s32 %v109, 120
    %v125 = vlaneseq
    %v126 = vand.u32 %v125, 127
    %vm127 = vcmp.eq.s32.totalorder %v109, %v126
    %vm128 = vcmp.eq.s32.totalorder %v110, %v126
    %vm129 = vcmp.eq.s32.totalorder %v111, %v126
    %vm130 = vcmp.eq.s32.totalorder %v112, %v126
    %vm131 = vcmp.eq.s32.totalorder %v113, %v126
    %vm132 = vcmp.eq.s32.totalorder %v114, %v126
    %vm133 = vcmp.eq.s32.totalorder %v115, %v126
    %vm134 = vcmp.eq.s32.totalorder %v116, %v126
    %vm135 = vcmp.eq.s32.totalorder %v117, %v126
    %vm136 = vcmp.eq.s32.totalorder %v118, %v126
    %vm137 = vcmp.eq.s32.totalorder %v119, %v126
    %vm138 = vcmp.eq.s32.totalorder %v120, %v126
    %vm139 = vcmp.eq.s32.totalorder %v121, %v126
    %vm140 = vcmp.eq.s32.totalorder %v122, %v126
    %vm141 = vcmp.eq.s32.totalorder %v123, %v126
    %vm142 = vcmp.eq.s32.totalorder %v124, %v126
    %v143 = vsel %vm127, 1, 0
    %v144 = vsel %vm128, 1, 0
    %v145 = vsel %vm129, 1, 0
    %v146 = vsel %vm130, 1, 0
    %v147 = vsel %vm131, 1, 0
    %v148 = vsel %vm132, 1, 0
    %v149 = vsel %vm133, 1, 0
    %v150 = vsel %vm134, 1, 0
    %v151 = vsel %vm135, 1, 0
    %v152 = vsel %vm136, 1, 0
    %v153 = vsel %vm137, 1, 0
    %v154 = vsel %vm138, 1, 0
    %v155 = vsel %vm139, 1, 0
    %v156 = vsel %vm140, 1, 0
    %v157 = vsel %vm141, 1, 0
    %v158 = vsel %vm142, 1, 0
    %v159 = vcvt.s32.f32 %v143
    %v160 = vcvt.s32.f32 %v144
    %v161 = vcvt.s32.f32 %v145
    %v162 = vcvt.s32.f32 %v146
    %v163 = vcvt.s32.f32 %v147
    %v164 = vcvt.s32.f32 %v148
    %v165 = vcvt.s32.f32 %v149
    %v166 = vcvt.s32.f32 %v150
    %v167 = vcvt.s32.f32 %v151
    %v168 = vcvt.s32.f32 %v152
    %v169 = vcvt.s32.f32 %v153
    %v170 = vcvt.s32.f32 %v154
    %v171 = vcvt.s32.f32 %v155
    %v172 = vcvt.s32.f32 %v156
    %v173 = vcvt.s32.f32 %v157
    %v174 = vcvt.s32.f32 %v158
    %v175 = vadd.f32 %v75, %v159
    %v176 = vadd.f32 %v76, %v160
    %v177 = vadd.f32 %v77, %v161
    %v178 = vadd.f32 %v78, %v162
    %v179 = vadd.f32 %v79, %v163
    %v180 = vadd.f32 %v80, %v164
    %v181 = vadd.f32 %v81, %v165
    %v182 = vadd.f32 %v82, %v166
    %v183 = vadd.f32 %v83, %v167
    %v184 = vadd.f32 %v84, %v168
    %v185 = vadd.f32 %v85, %v169
    %v186 = vadd.f32 %v86, %v170
    %v187 = vadd.f32 %v87, %v171
    %v188 = vadd.f32 %v88, %v172
    %v189 = vadd.f32 %v89, %v173
    %v190 = vadd.f32 %v90, %v174
    %192 = vset.pattern.permute.xlu0 0
    %193 = vperm.xlu0 %192, %v91
    %v194 = vpop.permute.xlu0 %193
    %197 = vset.pattern.permute.xlu0 0
    %198 = vperm.xlu0 %197, %v92
    %v199 = vpop.permute.xlu0 %198
    %202 = vset.pattern.permute.xlu0 0
    %203 = vperm.xlu0 %202, %v93
    %v204 = vpop.permute.xlu0 %203
    %207 = vset.pattern.permute.xlu0 0
    %208 = vperm.xlu0 %207, %v94
    %v209 = vpop.permute.xlu0 %208
    %212 = vset.pattern.permute.xlu0 0
    %213 = vperm.xlu0 %212, %v95
    %v214 = vpop.permute.xlu0 %213
    %217 = vset.pattern.permute.xlu0 0
    %218 = vperm.xlu0 %217, %v96
    %v219 = vpop.permute.xlu0 %218
    %222 = vset.pattern.permute.xlu0 0
    %223 = vperm.xlu0 %222, %v97
    %v224 = vpop.permute.xlu0 %223
    %227 = vset.pattern.permute.xlu0 0
    %228 = vperm.xlu0 %227, %v98
    %v229 = vpop.permute.xlu0 %228
    %232 = vset.pattern.permute.xlu0 0
    %233 = vperm.xlu0 %232, %v99
    %v234 = vpop.permute.xlu0 %233
    %237 = vset.pattern.permute.xlu0 0
    %238 = vperm.xlu0 %237, %v100
    %v239 = vpop.permute.xlu0 %238
    %242 = vset.pattern.permute.xlu0 0
    %243 = vperm.xlu0 %242, %v101
    %v244 = vpop.permute.xlu0 %243
    %247 = vset.pattern.permute.xlu0 0
    %248 = vperm.xlu0 %247, %v102
    %v249 = vpop.permute.xlu0 %248
    %252 = vset.pattern.permute.xlu0 0
    %253 = vperm.xlu0 %252, %v103
    %v254 = vpop.permute.xlu0 %253
    %257 = vset.pattern.permute.xlu0 0
    %258 = vperm.xlu0 %257, %v104
    %v259 = vpop.permute.xlu0 %258
    %262 = vset.pattern.permute.xlu0 0
    %263 = vperm.xlu0 %262, %v105
    %v264 = vpop.permute.xlu0 %263
    %267 = vset.pattern.permute.xlu0 0
    %268 = vperm.xlu0 %267, %v106
    %v269 = vpop.permute.xlu0 %268
    %v271 = vmul.f32 %v194, %v175
    %v272 = vmul.f32 %v199, %v176
    %v273 = vmul.f32 %v204, %v177
    %v274 = vmul.f32 %v209, %v178
    %v275 = vmul.f32 %v214, %v179
    %v276 = vmul.f32 %v219, %v180
    %v277 = vmul.f32 %v224, %v181
    %v278 = vmul.f32 %v229, %v182
    %v279 = vmul.f32 %v234, %v183
    %v280 = vmul.f32 %v239, %v184
    %v281 = vmul.f32 %v244, %v185
    %v282 = vmul.f32 %v249, %v186
    %v283 = vmul.f32 %v254, %v187
    %v284 = vmul.f32 %v259, %v188
    %v285 = vmul.f32 %v264, %v189
    %v286 = vmul.f32 %v269, %v190
    %v288 = vlaneseq
    %v289 = vshrl.u32 %v288, 7
    %v290 = vsub.s32 0, %v289
    %v291 = vrot.slane %v107, %v290
    %v293 = vmul.f32 %v271, %v291
    %v294 = vmul.f32 %v272, %v291
    %v295 = vmul.f32 %v273, %v291
    %v296 = vmul.f32 %v274, %v291
    %v297 = vmul.f32 %v275, %v291
    %v298 = vmul.f32 %v276, %v291
    %v299 = vmul.f32 %v277, %v291
    %v300 = vmul.f32 %v278, %v291
    %v301 = vmul.f32 %v279, %v291
    %v302 = vmul.f32 %v280, %v291
    %v303 = vmul.f32 %v281, %v291
    %v304 = vmul.f32 %v282, %v291
    %v305 = vmul.f32 %v283, %v291
    %v306 = vmul.f32 %v284, %v291
    %v307 = vmul.f32 %v285, %v291
    %v308 = vmul.f32 %v286, %v291
    %v309 = vmul.f32 %v293, 0.9
    %v310 = vmul.f32 %v294, 0.9
    %v311 = vmul.f32 %v295, 0.9
    %v312 = vmul.f32 %v296, 0.9
    %v313 = vmul.f32 %v297, 0.9
    %v314 = vmul.f32 %v298, 0.9
    %v315 = vmul.f32 %v299, 0.9
    %v316 = vmul.f32 %v300, 0.9
    %v317 = vmul.f32 %v301, 0.9
    %v318 = vmul.f32 %v302, 0.9
    %v319 = vmul.f32 %v303, 0.9
    %v320 = vmul.f32 %v304, 0.9
    %v321 = vmul.f32 %v305, 0.9
    %v322 = vmul.f32 %v306, 0.9
    %v323 = vmul.f32 %v307, 0.9
    %v324 = vmul.f32 %v308, 0.9
    %v325 = vmul.f32 %v159, 0.1
    %v326 = vmul.f32 %v160, 0.1
    %v327 = vmul.f32 %v161, 0.1
    %v328 = vmul.f32 %v162, 0.1
    %v329 = vmul.f32 %v163, 0.1
    %v330 = vmul.f32 %v164, 0.1
    %v331 = vmul.f32 %v165, 0.1
    %v332 = vmul.f32 %v166, 0.1
    %v333 = vmul.f32 %v167, 0.1
    %v334 = vmul.f32 %v168, 0.1
    %v335 = vmul.f32 %v169, 0.1
    %v336 = vmul.f32 %v170, 0.1
    %v337 = vmul.f32 %v171, 0.1
    %v338 = vmul.f32 %v172, 0.1
    %v339 = vmul.f32 %v173, 0.1
    %v340 = vmul.f32 %v174, 0.1
    %v341 = vadd.f32 %v309, %v325
    %v342 = vadd.f32 %v310, %v326
    %v343 = vadd.f32 %v311, %v327
    %v344 = vadd.f32 %v312, %v328
    %v345 = vadd.f32 %v313, %v329
    %v346 = vadd.f32 %v314, %v330
    %v347 = vadd.f32 %v315, %v331
    %v348 = vadd.f32 %v316, %v332
    %v349 = vadd.f32 %v317, %v333
    %v350 = vadd.f32 %v318, %v334
    %v351 = vadd.f32 %v319, %v335
    %v352 = vadd.f32 %v320, %v336
    %v353 = vadd.f32 %v321, %v337
    %v354 = vadd.f32 %v322, %v338
    %v355 = vadd.f32 %v323, %v339
    %v356 = vadd.f32 %v324, %v340
    %v357 = vpack.c.bf16 %v342, %v341
    %v358 = vpack.c.bf16 %v344, %v343
    %v359 = vpack.c.bf16 %v346, %v345
    %v360 = vpack.c.bf16 %v348, %v347
    %v361 = vpack.c.bf16 %v350, %v349
    %v362 = vpack.c.bf16 %v352, %v351
    %v363 = vpack.c.bf16 %v354, %v353
    %v364 = vpack.c.bf16 %v356, %v355
    %v365 = vld [vmem:[%s3] sm:$0xf]
    %v366 = vld [vmem:[%s3 + $0x4] sm:$0xf]
    %v367 = vld [vmem:[%s3 + $0x8] sm:$0xf]
    %v368 = vld [vmem:[%s3 + $0xc] sm:$0xf]
    %v369 = vld [vmem:[%s3 + $0x10] sm:$0xf]
    %v370 = vld [vmem:[%s3 + $0x14] sm:$0xf]
    %v371 = vld [vmem:[%s3 + $0x18] sm:$0xf]
    %v372 = vld [vmem:[%s3 + $0x1c] sm:$0xf]
    %v373 = vld [vmem:[%s3 + $0x20] sm:$0xf]
    %v374 = vld [vmem:[%s3 + $0x24] sm:$0xf]
    %v375 = vld [vmem:[%s3 + $0x28] sm:$0xf]
    %v376 = vld [vmem:[%s3 + $0x2c] sm:$0xf]
    %v377 = vld [vmem:[%s3 + $0x30] sm:$0xf]
    %v378 = vld [vmem:[%s3 + $0x34] sm:$0xf]
    %v379 = vld [vmem:[%s3 + $0x38] sm:$0xf]
    %v380 = vld [vmem:[%s3 + $0x3c] sm:$0xf]
    %v381 = vld [vmem:[#allocation2] sm:$0xf]
    %v382 = vld [vmem:[#allocation2 + $0x4] sm:$0xf]
    %v383 = vld [vmem:[#allocation2 + $0x8] sm:$0xf]
    %v384 = vld [vmem:[#allocation2 + $0xc] sm:$0xf]
    %v385 = vld [vmem:[#allocation2 + $0x10] sm:$0xf]
    %v386 = vld [vmem:[#allocation2 + $0x14] sm:$0xf]
    %v387 = vld [vmem:[#allocation2 + $0x18] sm:$0xf]
    %v388 = vld [vmem:[#allocation2 + $0x1c] sm:$0xf]
    %v389 = vld [vmem:[#allocation2 + $0x20] sm:$0xf]
    %v390 = vld [vmem:[#allocation2 + $0x24] sm:$0xf]
    %v391 = vld [vmem:[#allocation2 + $0x28] sm:$0xf]
    %v392 = vld [vmem:[#allocation2 + $0x2c] sm:$0xf]
    %v393 = vld [vmem:[#allocation2 + $0x30] sm:$0xf]
    %v394 = vld [vmem:[#allocation2 + $0x34] sm:$0xf]
    %v395 = vld [vmem:[#allocation2 + $0x38] sm:$0xf]
    %v396 = vld [vmem:[#allocation2 + $0x3c] sm:$0xf]
    %v413 = vunpack.c.l.b16 %v365
    %v414 = vunpack.c.l.b16 %v366
    %v415 = vunpack.c.l.b16 %v367
    %v416 = vunpack.c.l.b16 %v368
    %v417 = vunpack.c.l.b16 %v369
    %v418 = vunpack.c.l.b16 %v370
    %v419 = vunpack.c.l.b16 %v371
    %v420 = vunpack.c.l.b16 %v372
    %v421 = vunpack.c.l.b16 %v373
    %v422 = vunpack.c.l.b16 %v374
    %v423 = vunpack.c.l.b16 %v375
    %v424 = vunpack.c.l.b16 %v376
    %v425 = vunpack.c.l.b16 %v377
    %v426 = vunpack.c.l.b16 %v378
    %v427 = vunpack.c.l.b16 %v379
    %v428 = vunpack.c.l.b16 %v380
    %v429 = vpack.c.b16 %v414, %v413
    %v430 = vpack.c.b16 %v416, %v415
    %v431 = vpack.c.b16 %v418, %v417
    %v432 = vpack.c.b16 %v420, %v419
    %v433 = vpack.c.b16 %v422, %v421
    %v434 = vpack.c.b16 %v424, %v423
    %v435 = vpack.c.b16 %v426, %v425
    %v436 = vpack.c.b16 %v428, %v427
    %v461 = vunpack.c.l.b16 %v381
    %v462 = vunpack.c.l.b16 %v382
    %v463 = vunpack.c.l.b16 %v383
    %v464 = vunpack.c.l.b16 %v384
    %v465 = vunpack.c.l.b16 %v385
    %v466 = vunpack.c.l.b16 %v386
    %v467 = vunpack.c.l.b16 %v387
    %v468 = vunpack.c.l.b16 %v388
    %v469 = vunpack.c.l.b16 %v389
    %v470 = vunpack.c.l.b16 %v390
    %v471 = vunpack.c.l.b16 %v391
    %v472 = vunpack.c.l.b16 %v392
    %v473 = vunpack.c.l.b16 %v393
    %v474 = vunpack.c.l.b16 %v394
    %v475 = vunpack.c.l.b16 %v395
    %v476 = vunpack.c.l.b16 %v396
    %v477 = vpack.c.b16 %v462, %v461
    %v478 = vpack.c.b16 %v464, %v463
    %v479 = vpack.c.b16 %v466, %v465
    %v480 = vpack.c.b16 %v468, %v467
    %v481 = vpack.c.b16 %v470, %v469
    %v482 = vpack.c.b16 %v472, %v471
    %v483 = vpack.c.b16 %v474, %v473
    %v484 = vpack.c.b16 %v476, %v475
    %493 = vmatprep.subr.bf16.mxu0 0
    %494 = vmatpush1.bf16.msra.mxu0 %v484
    %495 = vmatprep.subr.bf16.mxu0 0
    %496 = vmatpush1.bf16.msra.mxu0 %v483
    %497 = vmatprep.subr.bf16.mxu0 0
    %498 = vmatpush1.bf16.msra.mxu0 %v482
    %499 = vmatprep.subr.bf16.mxu0 0
    %500 = vmatpush1.bf16.msra.mxu0 %v481
    %501 = vmatprep.subr.bf16.mxu0 0
    %502 = vmatpush1.bf16.msra.mxu0 %v480
    %503 = vmatprep.subr.bf16.mxu0 0
    %504 = vmatpush1.bf16.msra.mxu0 %v479
    %505 = vmatprep.subr.bf16.mxu0 0
    %506 = vmatpush1.bf16.msra.mxu0 %v478
    %507 = vmatprep.subr.bf16.mxu0 0
    %508 = vmatpush1.bf16.msra.mxu0 %v477
    %509 = vmatprep.subr.bf16.mxu0 0
    %510 = vmatpush2.bf16.msra.mxu0 0
    %511 = vmatprep.subr.bf16.mxu0 0
    %512 = vmatpush2.bf16.msra.mxu0 0
    %513 = vmatprep.subr.bf16.mxu0 0
    %514 = vmatpush2.bf16.msra.mxu0 0
    %515 = vmatprep.subr.bf16.mxu0 0
    %516 = vmatpush2.bf16.msra.mxu0 0
    %517 = vmatprep.subr.bf16.mxu0 0
    %518 = vmatpush2.bf16.msra.mxu0 0
    %519 = vmatprep.subr.bf16.mxu0 0
    %520 = vmatpush2.bf16.msra.mxu0 0
    %521 = vmatprep.subr.bf16.mxu0 0
    %522 = vmatpush2.bf16.msra.mxu0 0
    %523 = vmatprep.subr.bf16.mxu0 0
    %524 = vmatpush2.bf16.msra.mxu0 0
    %525 = vmatprep.mubr.bf16.mxu0 0
    %526 = vmatmul.mubr.bf16.gmra.mxu0 %v429
    %v527 = vpop.f32.mrf.mxu0
    %v528 = vadd.f32 0.0, %v527
    %v529 = vpop.f32.mrf.mxu0
    %v530 = vpop.f32.mrf.mxu0
    %v531 = vadd.f32 0.0, %v530
    %v532 = vpop.f32.mrf.mxu0
    %533 = vmatprep.mubr.bf16.mxu0 0
    %534 = vmatmul.mubr.bf16.gmra.mxu0 %v430
    %v535 = vpop.f32.mrf.mxu0
    %v536 = vadd.f32 0.0, %v535
    %v537 = vpop.f32.mrf.mxu0
    %v538 = vpop.f32.mrf.mxu0
    %v539 = vadd.f32 0.0, %v538
    %v540 = vpop.f32.mrf.mxu0
    %541 = vmatprep.mubr.bf16.mxu0 0
    %542 = vmatmul.mubr.bf16.gmra.mxu0 %v431
    %v543 = vpop.f32.mrf.mxu0
    %v544 = vadd.f32 0.0, %v543
    %v545 = vpop.f32.mrf.mxu0
    %v546 = vpop.f32.mrf.mxu0
    %v547 = vadd.f32 0.0, %v546
    %v548 = vpop.f32.mrf.mxu0
    %549 = vmatprep.mubr.bf16.mxu0 0
    %550 = vmatmul.mubr.bf16.gmra.mxu0 %v432
    %v551 = vpop.f32.mrf.mxu0
    %v552 = vadd.f32 0.0, %v551
    %v553 = vpop.f32.mrf.mxu0
    %v554 = vpop.f32.mrf.mxu0
    %v555 = vadd.f32 0.0, %v554
    %v556 = vpop.f32.mrf.mxu0
    %557 = vmatprep.mubr.bf16.mxu0 0
    %558 = vmatmul.mubr.bf16.gmra.mxu0 %v433
    %v559 = vpop.f32.mrf.mxu0
    %v560 = vadd.f32 0.0, %v559
    %v561 = vpop.f32.mrf.mxu0
    %v562 = vpop.f32.mrf.mxu0
    %v563 = vadd.f32 0.0, %v562
    %v564 = vpop.f32.mrf.mxu0
    %565 = vmatprep.mubr.bf16.mxu0 0
    %566 = vmatmul.mubr.bf16.gmra.mxu0 %v434
    %v567 = vpop.f32.mrf.mxu0
    %v568 = vadd.f32 0.0, %v567
    %v569 = vpop.f32.mrf.mxu0
    %v570 = vpop.f32.mrf.mxu0
    %v571 = vadd.f32 0.0, %v570
    %v572 = vpop.f32.mrf.mxu0
    %573 = vmatprep.mubr.bf16.mxu0 0
    %574 = vmatmul.mubr.bf16.gmra.mxu0 %v435
    %v575 = vpop.f32.mrf.mxu0
    %v576 = vadd.f32 0.0, %v575
    %v577 = vpop.f32.mrf.mxu0
    %v578 = vpop.f32.mrf.mxu0
    %v579 = vadd.f32 0.0, %v578
    %v580 = vpop.f32.mrf.mxu0
    %581 = vmatprep.mubr.bf16.mxu0 0
    %582 = vmatmul.mubr.bf16.gmra.mxu0 %v436
    %v583 = vpop.f32.mrf.mxu0
    %v584 = vadd.f32 0.0, %v583
    %v585 = vpop.f32.mrf.mxu0
    %v586 = vpop.f32.mrf.mxu0
    %v587 = vadd.f32 0.0, %v586
    %v588 = vpop.f32.mrf.mxu0
    %589 = vdwg.mxu0
    %v590 = vpack.c.bf16 %v531, %v528
    %v591 = vpack.c.bf16 %v539, %v536
    %v592 = vpack.c.bf16 %v547, %v544
    %v593 = vpack.c.bf16 %v555, %v552
    %v594 = vpack.c.bf16 %v563, %v560
    %v595 = vpack.c.bf16 %v571, %v568
    %v596 = vpack.c.bf16 %v579, %v576
    %v597 = vpack.c.bf16 %v587, %v584
    %v598 = vld [vmem:[%s5] sm:$0x1]
    %v600 = vlaneseq
    %v601 = vshrl.u32 %v600, 7
    %v602 = vsub.s32 0, %v601
    %v603 = vrot.slane %v598, %v602
    %605 = vmatprep.subr.bf16.mxu0 0
    %606 = vmatpush1.bf16.msra.mxu0 %v597
    %607 = vmatprep.subr.bf16.mxu0 0
    %608 = vmatpush1.bf16.msra.mxu0 %v596
    %609 = vmatprep.subr.bf16.mxu0 0
    %610 = vmatpush1.bf16.msra.mxu0 %v595
    %611 = vmatprep.subr.bf16.mxu0 0
    %612 = vmatpush1.bf16.msra.mxu0 %v594
    %613 = vmatprep.subr.bf16.mxu0 0
    %614 = vmatpush1.bf16.msra.mxu0 %v593
    %615 = vmatprep.subr.bf16.mxu0 0
    %616 = vmatpush1.bf16.msra.mxu0 %v592
    %617 = vmatprep.subr.bf16.mxu0 0
    %618 = vmatpush1.bf16.msra.mxu0 %v591
    %619 = vmatprep.subr.bf16.mxu0 0
    %620 = vmatpush1.bf16.msra.mxu0 %v590
    %621 = vmatprep.subr.bf16.mxu0 0
    %622 = vmatpush2.bf16.msra.mxu0 0
    %623 = vmatprep.subr.bf16.mxu0 0
    %624 = vmatpush2.bf16.msra.mxu0 0
    %625 = vmatprep.subr.bf16.mxu0 0
    %626 = vmatpush2.bf16.msra.mxu0 0
    %627 = vmatprep.subr.bf16.mxu0 0
    %628 = vmatpush2.bf16.msra.mxu0 0
    %629 = vmatprep.subr.bf16.mxu0 0
    %630 = vmatpush2.bf16.msra.mxu0 0
    %631 = vmatprep.subr.bf16.mxu0 0
    %632 = vmatpush2.bf16.msra.mxu0 0
    %633 = vmatprep.subr.bf16.mxu0 0
    %634 = vmatpush2.bf16.msra.mxu0 0
    %635 = vmatprep.subr.bf16.mxu0 0
    %636 = vmatpush2.bf16.msra.mxu0 0
    %637 = vmatprep.mubr.bf16.mxu0 0
    %638 = vmatmul.mubr.bf16.gmra.mxu0 %v357
    %v639 = vpop.f32.mrf.mxu0
    %v640 = vadd.f32 %v603, %v639
    %v641 = vpop.f32.mrf.mxu0
    %v642 = vpop.f32.mrf.mxu0
    %v643 = vadd.f32 %v603, %v642
    %v644 = vpop.f32.mrf.mxu0
    %645 = vmatprep.mubr.bf16.mxu0 0
    %646 = vmatmul.mubr.bf16.gmra.mxu0 %v358
    %v647 = vpop.f32.mrf.mxu0
    %v648 = vadd.f32 %v603, %v647
    %v649 = vpop.f32.mrf.mxu0
    %v650 = vpop.f32.mrf.mxu0
    %v651 = vadd.f32 %v603, %v650
    %v652 = vpop.f32.mrf.mxu0
    %653 = vmatprep.mubr.bf16.mxu0 0
    %654 = vmatmul.mubr.bf16.gmra.mxu0 %v359
    %v655 = vpop.f32.mrf.mxu0
    %v656 = vadd.f32 %v603, %v655
    %v657 = vpop.f32.mrf.mxu0
    %v658 = vpop.f32.mrf.mxu0
    %v659 = vadd.f32 %v603, %v658
    %v660 = vpop.f32.mrf.mxu0
    %661 = vmatprep.mubr.bf16.mxu0 0
    %662 = vmatmul.mubr.bf16.gmra.mxu0 %v360
    %v663 = vpop.f32.mrf.mxu0
    %v664 = vadd.f32 %v603, %v663
    %v665 = vpop.f32.mrf.mxu0
    %v666 = vpop.f32.mrf.mxu0
    %v667 = vadd.f32 %v603, %v666
    %v668 = vpop.f32.mrf.mxu0
    %669 = vmatprep.mubr.bf16.mxu0 0
    %670 = vmatmul.mubr.bf16.gmra.mxu0 %v361
    %v671 = vpop.f32.mrf.mxu0
    %v672 = vadd.f32 %v603, %v671
    %v673 = vpop.f32.mrf.mxu0
    %v674 = vpop.f32.mrf.mxu0
    %v675 = vadd.f32 %v603, %v674
    %v676 = vpop.f32.mrf.mxu0
    %677 = vmatprep.mubr.bf16.mxu0 0
    %678 = vmatmul.mubr.bf16.gmra.mxu0 %v362
    %v679 = vpop.f32.mrf.mxu0
    %v680 = vadd.f32 %v603, %v679
    %v681 = vpop.f32.mrf.mxu0
    %v682 = vpop.f32.mrf.mxu0
    %v683 = vadd.f32 %v603, %v682
    %v684 = vpop.f32.mrf.mxu0
    %685 = vmatprep.mubr.bf16.mxu0 0
    %686 = vmatmul.mubr.bf16.gmra.mxu0 %v363
    %v687 = vpop.f32.mrf.mxu0
    %v688 = vadd.f32 %v603, %v687
    %v689 = vpop.f32.mrf.mxu0
    %v690 = vpop.f32.mrf.mxu0
    %v691 = vadd.f32 %v603, %v690
    %v692 = vpop.f32.mrf.mxu0
    %693 = vmatprep.mubr.bf16.mxu0 0
    %694 = vmatmul.mubr.bf16.gmra.mxu0 %v364
    %v695 = vpop.f32.mrf.mxu0
    %v696 = vadd.f32 %v603, %v695
    %v697 = vpop.f32.mrf.mxu0
    %v698 = vpop.f32.mrf.mxu0
    %v699 = vadd.f32 %v603, %v698
    %v700 = vpop.f32.mrf.mxu0
    %701 = vdwg.mxu0
    %v702 = vmax.f32 %v640, 0.0
    %v703 = vmax.f32 %v643, 0.0
    %v704 = vmax.f32 %v648, 0.0
    %v705 = vmax.f32 %v651, 0.0
    %v706 = vmax.f32 %v656, 0.0
    %v707 = vmax.f32 %v659, 0.0
    %v708 = vmax.f32 %v664, 0.0
    %v709 = vmax.f32 %v667, 0.0
    %v710 = vmax.f32 %v672, 0.0
    %v711 = vmax.f32 %v675, 0.0
    %v712 = vmax.f32 %v680, 0.0
    %v713 = vmax.f32 %v683, 0.0
    %v714 = vmax.f32 %v688, 0.0
    %v715 = vmax.f32 %v691, 0.0
    %v716 = vmax.f32 %v696, 0.0
    %v717 = vmax.f32 %v699, 0.0
    %v718 = vpack.c.bf16 %v703, %v702
    %v719 = vpack.c.bf16 %v705, %v704
    %v720 = vpack.c.bf16 %v707, %v706
    %v721 = vpack.c.bf16 %v709, %v708
    %v722 = vpack.c.bf16 %v711, %v710
    %v723 = vpack.c.bf16 %v713, %v712
    %v724 = vpack.c.bf16 %v715, %v714
    %v725 = vpack.c.bf16 %v717, %v716
    %v726 = vld [vmem:[#allocation5] sm:$0xf]
    %v727 = vld [vmem:[#allocation5 + $0x4] sm:$0xf]
    %v728 = vld [vmem:[#allocation5 + $0x8] sm:$0xf]
    %v729 = vld [vmem:[#allocation5 + $0xc] sm:$0xf]
    %v730 = vld [vmem:[#allocation5 + $0x10] sm:$0xf]
    %v731 = vld [vmem:[#allocation5 + $0x14] sm:$0xf]
    %v732 = vld [vmem:[#allocation5 + $0x18] sm:$0xf]
    %v733 = vld [vmem:[#allocation5 + $0x1c] sm:$0xf]
    %v734 = vld [vmem:[#allocation5 + $0x20] sm:$0xf]
    %v735 = vld [vmem:[#allocation5 + $0x24] sm:$0xf]
    %v736 = vld [vmem:[#allocation5 + $0x28] sm:$0xf]
    %v737 = vld [vmem:[#allocation5 + $0x2c] sm:$0xf]
    %v738 = vld [vmem:[#allocation5 + $0x30] sm:$0xf]
    %v739 = vld [vmem:[#allocation5 + $0x34] sm:$0xf]
    %v740 = vld [vmem:[#allocation5 + $0x38] sm:$0xf]
    %v741 = vld [vmem:[#allocation5 + $0x3c] sm:$0xf]
    %v758 = vunpack.c.l.b16 %v726
    %v759 = vunpack.c.l.b16 %v727
    %v760 = vunpack.c.l.b16 %v728
    %v761 = vunpack.c.l.b16 %v729
    %v762 = vunpack.c.l.b16 %v730
    %v763 = vunpack.c.l.b16 %v731
    %v764 = vunpack.c.l.b16 %v732
    %v765 = vunpack.c.l.b16 %v733
    %v766 = vunpack.c.l.b16 %v734
    %v767 = vunpack.c.l.b16 %v735
    %v768 = vunpack.c.l.b16 %v736
    %v769 = vunpack.c.l.b16 %v737
    %v770 = vunpack.c.l.b16 %v738
    %v771 = vunpack.c.l.b16 %v739
    %v772 = vunpack.c.l.b16 %v740
    %v773 = vunpack.c.l.b16 %v741
    %v774 = vpack.c.b16 %v759, %v758
    %v775 = vpack.c.b16 %v761, %v760
    %v776 = vpack.c.b16 %v763, %v762
    %v777 = vpack.c.b16 %v765, %v764
    %v778 = vpack.c.b16 %v767, %v766
    %v779 = vpack.c.b16 %v769, %v768
    %v780 = vpack.c.b16 %v771, %v770
    %v781 = vpack.c.b16 %v773, %v772
    %790 = vmatprep.subr.bf16.mxu0 0
    %791 = vmatpush1.bf16.msra.mxu0 %v781
    %792 = vmatprep.subr.bf16.mxu0 0
    %793 = vmatpush1.bf16.msra.mxu0 %v780
    %794 = vmatprep.subr.bf16.mxu0 0
    %795 = vmatpush1.bf16.msra.mxu0 %v779
    %796 = vmatprep.subr.bf16.mxu0 0
    %797 = vmatpush1.bf16.msra.mxu0 %v778
    %798 = vmatprep.subr.bf16.mxu0 0
    %799 = vmatpush1.bf16.msra.mxu0 %v777
    %800 = vmatprep.subr.bf16.mxu0 0
    %801 = vmatpush1.bf16.msra.mxu0 %v776
    %802 = vmatprep.subr.bf16.mxu0 0
    %803 = vmatpush1.bf16.msra.mxu0 %v775
    %804 = vmatprep.subr.bf16.mxu0 0
    %805 = vmatpush1.bf16.msra.mxu0 %v774
    %806 = vmatprep.subr.bf16.mxu0 0
    %807 = vmatpush2.bf16.msra.mxu0 0
    %808 = vmatprep.subr.bf16.mxu0 0
    %809 = vmatpush2.bf16.msra.mxu0 0
    %810 = vmatprep.subr.bf16.mxu0 0
    %811 = vmatpush2.bf16.msra.mxu0 0
    %812 = vmatprep.subr.bf16.mxu0 0
    %813 = vmatpush2.bf16.msra.mxu0 0
    %814 = vmatprep.subr.bf16.mxu0 0
    %815 = vmatpush2.bf16.msra.mxu0 0
    %816 = vmatprep.subr.bf16.mxu0 0
    %817 = vmatpush2.bf16.msra.mxu0 0
    %818 = vmatprep.subr.bf16.mxu0 0
    %819 = vmatpush2.bf16.msra.mxu0 0
    %820 = vmatprep.subr.bf16.mxu0 0
    %821 = vmatpush2.bf16.msra.mxu0 0
    %822 = vmatprep.mubr.bf16.mxu0 0
    %823 = vmatmul.mubr.bf16.gmra.mxu0 %v718
    %v824 = vpop.f32.mrf.mxu0
    %v825 = vadd.f32 0.0, %v824
    %v826 = vpop.f32.mrf.mxu0
    %v827 = vpop.f32.mrf.mxu0
    %v828 = vadd.f32 0.0, %v827
    %v829 = vpop.f32.mrf.mxu0
    %830 = vmatprep.mubr.bf16.mxu0 0
    %831 = vmatmul.mubr.bf16.gmra.mxu0 %v719
    %v832 = vpop.f32.mrf.mxu0
    %v833 = vadd.f32 0.0, %v832
    %v834 = vpop.f32.mrf.mxu0
    %v835 = vpop.f32.mrf.mxu0
    %v836 = vadd.f32 0.0, %v835
    %v837 = vpop.f32.mrf.mxu0
    %838 = vmatprep.mubr.bf16.mxu0 0
    %839 = vmatmul.mubr.bf16.gmra.mxu0 %v720
    %v840 = vpop.f32.mrf.mxu0
    %v841 = vadd.f32 0.0, %v840
    %v842 = vpop.f32.mrf.mxu0
    %v843 = vpop.f32.mrf.mxu0
    %v844 = vadd.f32 0.0, %v843
    %v845 = vpop.f32.mrf.mxu0
    %846 = vmatprep.mubr.bf16.mxu0 0
    %847 = vmatmul.mubr.bf16.gmra.mxu0 %v721
    %v848 = vpop.f32.mrf.mxu0
    %v849 = vadd.f32 0.0, %v848
    %v850 = vpop.f32.mrf.mxu0
    %v851 = vpop.f32.mrf.mxu0
    %v852 = vadd.f32 0.0, %v851
    %v853 = vpop.f32.mrf.mxu0
    %854 = vmatprep.mubr.bf16.mxu0 0
    %855 = vmatmul.mubr.bf16.gmra.mxu0 %v722
    %v856 = vpop.f32.mrf.mxu0
    %v857 = vadd.f32 0.0, %v856
    %v858 = vpop.f32.mrf.mxu0
    %v859 = vpop.f32.mrf.mxu0
    %v860 = vadd.f32 0.0, %v859
    %v861 = vpop.f32.mrf.mxu0
    %862 = vmatprep.mubr.bf16.mxu0 0
    %863 = vmatmul.mubr.bf16.gmra.mxu0 %v723
    %v864 = vpop.f32.mrf.mxu0
    %v865 = vadd.f32 0.0, %v864
    %v866 = vpop.f32.mrf.mxu0
    %v867 = vpop.f32.mrf.mxu0
    %v868 = vadd.f32 0.0, %v867
    %v869 = vpop.f32.mrf.mxu0
    %870 = vmatprep.mubr.bf16.mxu0 0
    %871 = vmatmul.mubr.bf16.gmra.mxu0 %v724
    %v872 = vpop.f32.mrf.mxu0
    %v873 = vadd.f32 0.0, %v872
    %v874 = vpop.f32.mrf.mxu0
    %v875 = vpop.f32.mrf.mxu0
    %v876 = vadd.f32 0.0, %v875
    %v877 = vpop.f32.mrf.mxu0
    %878 = vmatprep.mubr.bf16.mxu0 0
    %879 = vmatmul.mubr.bf16.gmra.mxu0 %v725
    %v880 = vpop.f32.mrf.mxu0
    %v881 = vadd.f32 0.0, %v880
    %v882 = vpop.f32.mrf.mxu0
    %v883 = vpop.f32.mrf.mxu0
    %v884 = vadd.f32 0.0, %v883
    %v885 = vpop.f32.mrf.mxu0
    %886 = vdwg.mxu0
    %v887 = vpack.c.bf16 %v828, %v825
    %v888 = vpack.c.bf16 %v836, %v833
    %v889 = vpack.c.bf16 %v844, %v841
    %v890 = vpack.c.bf16 %v852, %v849
    %v891 = vpack.c.bf16 %v860, %v857
    %v892 = vpack.c.bf16 %v868, %v865
    %v893 = vpack.c.bf16 %v876, %v873
    %v894 = vpack.c.bf16 %v884, %v881
    %v895 = vld [vmem:[%s7] sm:$0x1]
    %v897 = vlaneseq
    %v898 = vshrl.u32 %v897, 7
    %v899 = vsub.s32 0, %v898
    %v900 = vrot.slane %v895, %v899
    %902 = vmatprep.subr.bf16.mxu0 0
    %903 = vmatpush1.bf16.msra.mxu0 %v894
    %904 = vmatprep.subr.bf16.mxu0 0
    %905 = vmatpush1.bf16.msra.mxu0 %v893
    %906 = vmatprep.subr.bf16.mxu0 0
    %907 = vmatpush1.bf16.msra.mxu0 %v892
    %908 = vmatprep.subr.bf16.mxu0 0
    %909 = vmatpush1.bf16.msra.mxu0 %v891
    %910 = vmatprep.subr.bf16.mxu0 0
    %911 = vmatpush1.bf16.msra.mxu0 %v890
    %912 = vmatprep.subr.bf16.mxu0 0
    %913 = vmatpush1.bf16.msra.mxu0 %v889
    %914 = vmatprep.subr.bf16.mxu0 0
    %915 = vmatpush1.bf16.msra.mxu0 %v888
    %916 = vmatprep.subr.bf16.mxu0 0
    %917 = vmatpush1.bf16.msra.mxu0 %v887
    %918 = vmatprep.subr.bf16.mxu0 0
    %919 = vmatpush2.bf16.msra.mxu0 0
    %920 = vmatprep.subr.bf16.mxu0 0
    %921 = vmatpush2.bf16.msra.mxu0 0
    %922 = vmatprep.subr.bf16.mxu0 0
    %923 = vmatpush2.bf16.msra.mxu0 0
    %924 = vmatprep.subr.bf16.mxu0 0
    %925 = vmatpush2.bf16.msra.mxu0 0
    %926 = vmatprep.subr.bf16.mxu0 0
    %927 = vmatpush2.bf16.msra.mxu0 0
    %928 = vmatprep.subr.bf16.mxu0 0
    %929 = vmatpush2.bf16.msra.mxu0 0
    %930 = vmatprep.subr.bf16.mxu0 0
    %931 = vmatpush2.bf16.msra.mxu0 0
    %932 = vmatprep.subr.bf16.mxu0 0
    %933 = vmatpush2.bf16.msra.mxu0 0
    %934 = vmatprep.mubr.bf16.mxu0 0
    %935 = vmatmul.mubr.bf16.gmra.mxu0 %v357
    %v936 = vpop.f32.mrf.mxu0
    %v937 = vadd.f32 %v900, %v936
    %v938 = vpop.f32.mrf.mxu0
    %v939 = vpop.f32.mrf.mxu0
    %v940 = vadd.f32 %v900, %v939
    %v941 = vpop.f32.mrf.mxu0
    %942 = vmatprep.mubr.bf16.mxu0 0
    %943 = vmatmul.mubr.bf16.gmra.mxu0 %v358
    %v944 = vpop.f32.mrf.mxu0
    %v945 = vadd.f32 %v900, %v944
    %v946 = vpop.f32.mrf.mxu0
    %v947 = vpop.f32.mrf.mxu0
    %v948 = vadd.f32 %v900, %v947
    %v949 = vpop.f32.mrf.mxu0
    %950 = vmatprep.mubr.bf16.mxu0 0
    %951 = vmatmul.mubr.bf16.gmra.mxu0 %v359
    %v952 = vpop.f32.mrf.mxu0
    %v953 = vadd.f32 %v900, %v952
    %v954 = vpop.f32.mrf.mxu0
    %v955 = vpop.f32.mrf.mxu0
    %v956 = vadd.f32 %v900, %v955
    %v957 = vpop.f32.mrf.mxu0
    %958 = vmatprep.mubr.bf16.mxu0 0
    %959 = vmatmul.mubr.bf16.gmra.mxu0 %v360
    %v960 = vpop.f32.mrf.mxu0
    %v961 = vadd.f32 %v900, %v960
    %v962 = vpop.f32.mrf.mxu0
    %v963 = vpop.f32.mrf.mxu0
    %v964 = vadd.f32 %v900, %v963
    %v965 = vpop.f32.mrf.mxu0
    %966 = vmatprep.mubr.bf16.mxu0 0
    %967 = vmatmul.mubr.bf16.gmra.mxu0 %v361
    %v968 = vpop.f32.mrf.mxu0
    %v969 = vadd.f32 %v900, %v968
    %v970 = vpop.f32.mrf.mxu0
    %v971 = vpop.f32.mrf.mxu0
    %v972 = vadd.f32 %v900, %v971
    %v973 = vpop.f32.mrf.mxu0
    %974 = vmatprep.mubr.bf16.mxu0 0
    %975 = vmatmul.mubr.bf16.gmra.mxu0 %v362
    %v976 = vpop.f32.mrf.mxu0
    %v977 = vadd.f32 %v900, %v976
    %v978 = vpop.f32.mrf.mxu0
    %v979 = vpop.f32.mrf.mxu0
    %v980 = vadd.f32 %v900, %v979
    %v981 = vpop.f32.mrf.mxu0
    %982 = vmatprep.mubr.bf16.mxu0 0
    %983 = vmatmul.mubr.bf16.gmra.mxu0 %v363
    %v984 = vpop.f32.mrf.mxu0
    %v985 = vadd.f32 %v900, %v984
    %v986 = vpop.f32.mrf.mxu0
    %v987 = vpop.f32.mrf.mxu0
    %v988 = vadd.f32 %v900, %v987
    %v989 = vpop.f32.mrf.mxu0
    %990 = vmatprep.mubr.bf16.mxu0 0
    %991 = vmatmul.mubr.bf16.gmra.mxu0 %v364
    %v992 = vpop.f32.mrf.mxu0
    %v993 = vadd.f32 %v900, %v992
    %v994 = vpop.f32.mrf.mxu0
    %v995 = vpop.f32.mrf.mxu0
    %v996 = vadd.f32 %v900, %v995
    %v997 = vpop.f32.mrf.mxu0
    %998 = vdwg.mxu0
    %999 = vst [vmem:[#allocation7] sm:$0xff] %v937
    %1000 = vst [vmem:[#allocation7 + $0x8] sm:$0xff] %v940
    %1001 = vst [vmem:[#allocation7 + $0x10] sm:$0xff] %v945
    %1002 = vst [vmem:[#allocation7 + $0x18] sm:$0xff] %v948
    %1003 = vst [vmem:[#allocation7 + $0x20] sm:$0xff] %v953
    %1004 = vst [vmem:[#allocation7 + $0x28] sm:$0xff] %v956
    %1005 = vst [vmem:[#allocation7 + $0x30] sm:$0xff] %v961
    %1006 = vst [vmem:[#allocation7 + $0x38] sm:$0xff] %v964
    %1007 = vst [vmem:[#allocation7 + $0x40] sm:$0xff] %v969
    %1008 = vst [vmem:[#allocation7 + $0x48] sm:$0xff] %v972
    %1009 = vst [vmem:[#allocation7 + $0x50] sm:$0xff] %v977
    %1010 = vst [vmem:[#allocation7 + $0x58] sm:$0xff] %v980
    %1011 = vst [vmem:[#allocation7 + $0x60] sm:$0xff] %v985
    %1012 = vst [vmem:[#allocation7 + $0x68] sm:$0xff] %v988
    %1013 = vst [vmem:[#allocation7 + $0x70] sm:$0xff] %v993
    %1014 = vst [vmem:[#allocation7 + $0x78] sm:$0xff] %v996
    // Predicated region
    $region42: #{tpu_custom_call.1} parent=1 // pred_check
      _
    $region43: #{tpu_custom_call.1} parent=1 // pred_check_branch
      %1016 = sbr.rel (0) target = $region45
    $region44: #{tpu_custom_call.1} parent=1 // pred_region
      %s1018 = ssub.s32 2048, 2048
      %1019 = vsyncadd [#allocation4], %s1018
      %s1020 = sshll.u32 [#allocation7], 4
      %s1021 = int_to_ptr.vmem [resolvable:$true] %s1020
      %1026 = dma.vmem_to_hbm [thread:$0]  %s1021, 2048, %s8, [#allocation4], 128, 128, 8
    $region45: #{tpu_custom_call.1} parent=1 // pred_fallthru
      _
    // Predicated region
    $region46: #{tpu_custom_call.1} parent=1 // pred_check
      _
    $region47: #{tpu_custom_call.1} parent=1 // pred_check_branch
      %1028 = sbr.rel (0) target = $region49
    $region48: #{tpu_custom_call.1} parent=1 // pred_region
      %1029 = dma.done [#allocation4], 2048
    $region49: #{tpu_custom_call.1} parent=1 // pred_fallthru
      _
    %1030 = vsyncpa [#allocation3], 1
    %1031 = vsyncpa [#allocation6], 1
    %1032 = vsyncpa [#allocation4], 1

</llo_original>
